<compile_context>
chip_gen: v7x
topology: tpu7x:2x2x1
jax: 0.10.0
libtpu: 0.0.40
codegen_flags: <defaults>
</compile_context>

<pallas_src>
import jax
import jax.numpy as jnp
import numpy as np
from jax.experimental import pallas as pl
from jax.experimental.pallas import tpu as pltpu


def _round_up(x, m):
    return ((x + m - 1) // m) * m


def _gemm_bias_relu_kernel(p_ref, w_ref, b_ref, o_ref):
    """One M-tile per grid step.

    p_ref: (tm, K)          VMEM, bf16  (im2col patches)
    w_ref: (K, Cout_pad)    VMEM, bf16  (constant across grid)
    b_ref: (1, Cout_pad)    VMEM, f32   (constant across grid)
    o_ref: (tm, Cout_pad)   VMEM, f32   (lane-dense: Cout_pad % 128 == 0)
    """
    acc = jnp.dot(p_ref[...], w_ref[...], preferred_element_type=jnp.float32)
    acc = acc + b_ref[...]                          # bias broadcast (f32)
    o_ref[...] = jnp.maximum(acc, 0.0).astype(o_ref.dtype)   # ReLU


def basic_conv2d(x_nchw, weight_oihw, bias, *, block_m=1024):
    """Conv2d(stride=1, padding=0, bias=True) + ReLU, matching nn.Conv2d semantics.

    x_nchw:      (N, Cin, H, W)
    weight_oihw: (Cout, Cin, KH, KW)
    bias:        (Cout,)
    returns:     (N, Cout, Hout, Wout)
    """
    n, cin, h, w = x_nchw.shape
    cout, cin_w, kh, kw = weight_oihw.shape
    assert cin == cin_w
    h_out = h - kh + 1
    w_out = w - kw + 1
    k_dim = kh * kw * cin
    cout_pad = _round_up(cout, 128)                 # lane-dense output channels

    m = n * h_out * w_out                           # flattened GEMM rows
    tm = min(block_m, _round_up(m, 8))              # one step at toy sizes
    m_pad = _round_up(m, tm)
    grid_m = m_pad // tm
    # TODO(synk): at production Inception sizes (Cin up to ~1280), re-derive tm /
    # Cout tiling (>=256 on v6e/v7x) against v7x's 64 MiB VMEM.

    # --- wrapper-side im2col: single bf16 cast, then 9 shifted-window slices.
    # Column order is (i*KW + j)*Cin + c, matching the weight matrix below.
    x_nhwc = jnp.transpose(x_nchw, (0, 2, 3, 1)).astype(jnp.bfloat16)  # (N,H,W,Cin)
    taps = [x_nhwc[:, i:i + h_out, j:j + w_out, :]
            for i in range(kh) for j in range(kw)]
    patches = jnp.concatenate(taps, axis=-1).reshape(m, k_dim)         # (M, K) bf16
    if m_pad != m:
        patches = jnp.pad(patches, ((0, m_pad - m), (0, 0)))

    # OIHW -> (KH, KW, Cin, Cout) -> (K, Cout), rows ordered (i*KW + j)*Cin + c.
    w_mat = jnp.transpose(weight_oihw, (2, 3, 1, 0)).reshape(k_dim, cout)
    w_mat = jnp.pad(w_mat, ((0, 0), (0, cout_pad - cout))).astype(jnp.bfloat16)
    b_pad = jnp.pad(bias, (0, cout_pad - cout)).reshape(1, cout_pad).astype(jnp.float32)

    out_flat = pl.pallas_call(
        _gemm_bias_relu_kernel,
        out_shape=jax.ShapeDtypeStruct((m_pad, cout_pad), jnp.float32),
        grid_spec=pltpu.PrefetchScalarGridSpec(
            num_scalar_prefetch=0,
            grid=(grid_m,),
            in_specs=[
                pl.BlockSpec((tm, k_dim), lambda i: (i, 0)),
                pl.BlockSpec((k_dim, cout_pad), lambda i: (0, 0)),   # resident weight
                pl.BlockSpec((1, cout_pad), lambda i: (0, 0)),       # resident bias
            ],
            out_specs=pl.BlockSpec((tm, cout_pad), lambda i: (i, 0)),
        ),
        compiler_params=pltpu.CompilerParams(
            dimension_semantics=("parallel",),
        ),
    )(patches, w_mat, b_pad)

    # Drop row/channel padding, back to NCHW for the PyTorch-style interface.
    out = out_flat[:m, :cout].reshape(n, h_out, w_out, cout)
    return jnp.transpose(out, (0, 3, 1, 2))


if __name__ == "__main__":
    key = jax.random.PRNGKey(0)
    k_x, k_w, k_b = jax.random.split(key, 3)

    # BasicConv2d(in_channels=4, out_channels=8, kernel_size=3)
    N, CIN, H, W = 2, 4, 16, 16
    COUT, KH, KW = 8, 3, 3

    x = jax.random.normal(k_x, (N, CIN, H, W), dtype=jnp.float32)

    # Deterministic "kaiming-uniform-like" init (same bounds as PyTorch defaults).
    fan_in = CIN * KH * KW
    w_bound = float(np.sqrt(1.0 / fan_in))
    weight = jax.random.uniform(
        k_w, (COUT, CIN, KH, KW), minval=-w_bound, maxval=w_bound, dtype=jnp.float32
    )
    bias = jax.random.uniform(
        k_b, (COUT,), minval=-w_bound, maxval=w_bound, dtype=jnp.float32
    )

    out = basic_conv2d(x, weight, bias)
    out = jax.block_until_ready(out)

    # Pure-JAX f32 reference (kernel uses bf16 MXU operands with f32 accumulation,
    # so compare with a relaxed tolerance).
    ref = jax.lax.conv_general_dilated(
        x, weight, window_strides=(1, 1), padding="VALID",
        dimension_numbers=("NCHW", "OIHW", "NCHW"),
    ) + bias.reshape(1, COUT, 1, 1)
    ref = jnp.maximum(ref, 0.0)

    np.testing.assert_allclose(np.asarray(out), np.asarray(ref), atol=2e-2, rtol=2e-2)
    assert out.shape == (N, COUT, H - KH + 1, W - KW + 1)

    print("KERNEL_OK")
</pallas_src>

<mosaic_0001>
module attributes {stable_mosaic.version = 11 : i64} {
  func.func @_gemm_bias_relu_kernel(%arg0: i32, %arg1: memref<392x36xbf16, #tpu.memory_space<vmem>>, %arg2: memref<36x128xbf16, #tpu.memory_space<vmem>>, %arg3: memref<1x128xf32, #tpu.memory_space<vmem>>, %arg4: memref<392x128xf32, #tpu.memory_space<vmem>>) attributes {dimension_semantics = [#tpu.dimension_semantics<parallel>], iteration_bounds = array<i64: 1>, scalar_prefetch = 0 : i64, scratch_operands = 0 : i64, tpu.core_type = #tpu.core_type<tc>, window_params = [{transform_indices = @transform_0, window_bounds = array<i64: 392, 36>}, {pipeline_mode = #tpu.pipeline_mode<synchronous>, transform_indices = @transform_1, window_bounds = array<i64: 36, 128>}, {pipeline_mode = #tpu.pipeline_mode<synchronous>, transform_indices = @transform_2, window_bounds = array<i64: 1, 128>}, {transform_indices = @transform_3, window_bounds = array<i64: 392, 128>}]} {
    %c0 = arith.constant 0 : index
    %c0_0 = arith.constant 0 : index
    %0 = vector.load %arg1[%c0, %c0_0] : memref<392x36xbf16, #tpu.memory_space<vmem>>, vector<392x36xbf16>
    %c0_1 = arith.constant 0 : index
    %c0_2 = arith.constant 0 : index
    %1 = vector.load %arg2[%c0_1, %c0_2] : memref<36x128xbf16, #tpu.memory_space<vmem>>, vector<36x128xbf16>
    %cst = arith.constant dense<0.000000e+00> : vector<392x128xf32>
    %2 = tpu.matmul %0, %1, %cst {dimension_numbers = #tpu.dot_dimension_numbers<[1], [0], [0], [1], [0, 0, 1, 1], [], []>} : vector<392x36xbf16>, vector<36x128xbf16>, vector<392x128xf32> -> vector<392x128xf32>
    %c0_3 = arith.constant 0 : index
    %c0_4 = arith.constant 0 : index
    %3 = vector.load %arg3[%c0_3, %c0_4] : memref<1x128xf32, #tpu.memory_space<vmem>>, vector<1x128xf32>
    %4 = vector.broadcast %3 : vector<1x128xf32> to vector<392x128xf32>
    %5 = arith.addf %2, %4 : vector<392x128xf32>
    %cst_5 = arith.constant 0.000000e+00 : f32
    %6 = vector.broadcast %cst_5 : f32 to vector<392x128xf32>
    %7 = arith.maximumf %5, %6 : vector<392x128xf32>
    %c0_6 = arith.constant 0 : index
    %c0_7 = arith.constant 0 : index
    %8 = vector.load %arg4[%c0_6, %c0_7] : memref<392x128xf32, #tpu.memory_space<vmem>>, vector<392x128xf32>
    tpu.vector_store %arg4[%c0_6, %c0_7], %7 {strides = array<i32>} : memref<392x128xf32, #tpu.memory_space<vmem>>, vector<392x128xf32>,
    return
  }
  func.func @transform_0(%arg0: i32) -> (i32, i32) {
    %c0_i32 = arith.constant 0 : i32
    %c0_i32_0 = arith.constant 0 : i32
    return %arg0, %c0_i32 : i32, i32
  }
  func.func @transform_1(%arg0: i32) -> (i32, i32) {
    %c0_i32 = arith.constant 0 : i32
    %c0_i32_0 = arith.constant 0 : i32
    %c0_i32_1 = arith.constant 0 : i32
    return %c0_i32, %c0_i32_0 : i32, i32
  }
  func.func @transform_2(%arg0: i32) -> (i32, i32) {
    %c0_i32 = arith.constant 0 : i32
    %c0_i32_0 = arith.constant 0 : i32
    %c0_i32_1 = arith.constant 0 : i32
    return %c0_i32, %c0_i32_0 : i32, i32
  }
  func.func @transform_3(%arg0: i32) -> (i32, i32) {
    %c0_i32 = arith.constant 0 : i32
    %c0_i32_0 = arith.constant 0 : i32
    return %arg0, %c0_i32 : i32, i32
  }
}

</mosaic_0001>

<llo_original>
// kernel: tpu_custom_call.1
$region0: #{tpu_custom_call.1}
  #allocation0 [shape = 'u32[]', space=smem, size = 0x4, offset = 0x4, fixed_abs, tag = 'smem constant byte address 0x4 - core index']
  #allocation1 [shape = 'u32[144,128]{1,0:T(1,128)}', space=vmem, size = 0x12000, scoped, tag = 'internal scratch']
  %s0 = inlined_call_operand.vmem [shape: bf16[392,36], index: 0, kind: input, shape index: {}]
  %s1 = inlined_call_operand.vmem [shape: bf16[36,128], index: 1, kind: input, shape index: {}]
  %s2 = inlined_call_operand.vmem [shape: f32[1,128], index: 2, kind: input, shape index: {}]
  %s3 = inlined_call_operand.hbm [shape: f32[392,128], index: 3, kind: output, shape index: {}]
  %s4 = sld [smem:[#allocation0]]
  $region22: #{tpu_custom_call.1} parent=0
    _
  %s6 = ssub.s32 1, %s4
  %s7 = scalar_select 0, %s6, %s4
  $region1: #{tpu_custom_call.1} parent=0
    #allocation2 [shape = 'u8[200704]{0}', space=vmem, size = 0x31000, scoped, tag = 'output window, operand 0, single buffered']
    #allocation3 [shape = 's32[1]{0}', space=sflag, size = 0x4, scoped, tag = 'scoped memory for tpu_custom_call.1']
    %8 = vsyncpa [#allocation3], 0
    // Predicated region
    $region2: #{tpu_custom_call.1} parent=1 // pred_check
      _
    $region3: #{tpu_custom_call.1} parent=1 // pred_check_branch
      %10 = sbr.rel (0) target = $region5
    $region4: #{tpu_custom_call.1} parent=1 // pred_region
      _
    $region5: #{tpu_custom_call.1} parent=1 // pred_fallthru
      _
    // Predicated region
    $region6: #{tpu_custom_call.1} parent=1 // pred_check
      _
    $region7: #{tpu_custom_call.1} parent=1 // pred_check_branch
      %12 = sbr.rel (0) target = $region9
    $region8: #{tpu_custom_call.1} parent=1 // pred_region
      _
    $region9: #{tpu_custom_call.1} parent=1 // pred_fallthru
      _
    // Predicated region
    $region10: #{tpu_custom_call.1} parent=1 // pred_check
      _
    $region11: #{tpu_custom_call.1} parent=1 // pred_check_branch
      %14 = sbr.rel (0) target = $region13
    $region12: #{tpu_custom_call.1} parent=1 // pred_region
      _
    $region13: #{tpu_custom_call.1} parent=1 // pred_fallthru
      _
    %v16 = vld [vmem:[%s0] sm:$0xf]
    %v17 = vld [vmem:[%s0 + $0x4] sm:$0xf]
    %v18 = vld [vmem:[%s0 + $0x8] sm:$0xf]
    %v19 = vld [vmem:[%s0 + $0xc] sm:$0xf]
    %v20 = vld [vmem:[%s0 + $0x10] sm:$0xf]
    %v21 = vld [vmem:[%s0 + $0x14] sm:$0xf]
    %v22 = vld [vmem:[%s0 + $0x18] sm:$0xf]
    %v23 = vld [vmem:[%s0 + $0x1c] sm:$0xf]
    %v24 = vld [vmem:[%s0 + $0x20] sm:$0xf]
    %v25 = vld [vmem:[%s0 + $0x24] sm:$0xf]
    %v26 = vld [vmem:[%s0 + $0x28] sm:$0xf]
    %v27 = vld [vmem:[%s0 + $0x2c] sm:$0xf]
    %v28 = vld [vmem:[%s0 + $0x30] sm:$0xf]
    %v29 = vld [vmem:[%s0 + $0x34] sm:$0xf]
    %v30 = vld [vmem:[%s0 + $0x38] sm:$0xf]
    %v31 = vld [vmem:[%s0 + $0x3c] sm:$0xf]
    %v32 = vld [vmem:[%s0 + $0x40] sm:$0xf]
    %v33 = vld [vmem:[%s0 + $0x44] sm:$0xf]
    %v34 = vld [vmem:[%s0 + $0x48] sm:$0xf]
    %v35 = vld [vmem:[%s0 + $0x4c] sm:$0xf]
    %v36 = vld [vmem:[%s0 + $0x50] sm:$0xf]
    %v37 = vld [vmem:[%s0 + $0x54] sm:$0xf]
    %v38 = vld [vmem:[%s0 + $0x58] sm:$0xf]
    %v39 = vld [vmem:[%s0 + $0x5c] sm:$0xf]
    %v40 = vld [vmem:[%s0 + $0x60] sm:$0xf]
    %v41 = vld [vmem:[%s0 + $0x64] sm:$0xf]
    %v42 = vld [vmem:[%s0 + $0x68] sm:$0xf]
    %v43 = vld [vmem:[%s0 + $0x6c] sm:$0xf]
    %v44 = vld [vmem:[%s0 + $0x70] sm:$0xf]
    %v45 = vld [vmem:[%s0 + $0x74] sm:$0xf]
    %v46 = vld [vmem:[%s0 + $0x78] sm:$0xf]
    %v47 = vld [vmem:[%s0 + $0x7c] sm:$0xf]
    %v48 = vld [vmem:[%s0 + $0x80] sm:$0xf]
    %v49 = vld [vmem:[%s0 + $0x84] sm:$0xf]
    %v50 = vld [vmem:[%s0 + $0x88] sm:$0xf]
    %v51 = vld [vmem:[%s0 + $0x8c] sm:$0xf]
    %v52 = vld [vmem:[%s0 + $0x90] sm:$0xf]
    %v53 = vld [vmem:[%s0 + $0x94] sm:$0xf]
    %v54 = vld [vmem:[%s0 + $0x98] sm:$0xf]
    %v55 = vld [vmem:[%s0 + $0x9c] sm:$0xf]
    %v56 = vld [vmem:[%s0 + $0xa0] sm:$0xf]
    %v57 = vld [vmem:[%s0 + $0xa4] sm:$0xf]
    %v58 = vld [vmem:[%s0 + $0xa8] sm:$0xf]
    %v59 = vld [vmem:[%s0 + $0xac] sm:$0xf]
    %v60 = vld [vmem:[%s0 + $0xb0] sm:$0xf]
    %v61 = vld [vmem:[%s0 + $0xb4] sm:$0xf]
    %v62 = vld [vmem:[%s0 + $0xb8] sm:$0xf]
    %v63 = vld [vmem:[%s0 + $0xbc] sm:$0xf]
    %v64 = vld [vmem:[%s0 + $0xc0] sm:$0xf]
    %v65 = vld [vmem:[%s1] sm:$0xf]
    %v66 = vld [vmem:[%s1 + $0x4] sm:$0xf]
    %v67 = vld [vmem:[%s1 + $0x8] sm:$0xf]
    %v68 = vld [vmem:[%s1 + $0xc] sm:$0xf]
    %v69 = vld [vmem:[%s1 + $0x10] sm:$0x3]
    %v70 = vld [vmem:[%s2] sm:$0x1]
    %v72 = vlaneseq
    %v73 = vshrl.u32 %v72, 7
    %v74 = vsub.s32 0, %v73
    %v75 = vrot.slane %v70, %v74
    %v126 = vunpack.c.l.b16 %v16
    %v127 = vunpack.c.l.b16 %v17
    %v128 = vunpack.c.l.b16 %v18
    %v129 = vunpack.c.l.b16 %v19
    %v130 = vunpack.c.l.b16 %v20
    %v131 = vunpack.c.l.b16 %v21
    %v132 = vunpack.c.l.b16 %v22
    %v133 = vunpack.c.l.b16 %v23
    %v134 = vunpack.c.l.b16 %v24
    %v135 = vunpack.c.l.b16 %v25
    %v136 = vunpack.c.l.b16 %v26
    %v137 = vunpack.c.l.b16 %v27
    %v138 = vunpack.c.l.b16 %v28
    %v139 = vunpack.c.l.b16 %v29
    %v140 = vunpack.c.l.b16 %v30
    %v141 = vunpack.c.l.b16 %v31
    %v142 = vunpack.c.l.b16 %v32
    %v143 = vunpack.c.l.b16 %v33
    %v144 = vunpack.c.l.b16 %v34
    %v145 = vunpack.c.l.b16 %v35
    %v146 = vunpack.c.l.b16 %v36
    %v147 = vunpack.c.l.b16 %v37
    %v148 = vunpack.c.l.b16 %v38
    %v149 = vunpack.c.l.b16 %v39
    %v150 = vunpack.c.l.b16 %v40
    %v151 = vunpack.c.l.b16 %v41
    %v152 = vunpack.c.l.b16 %v42
    %v153 = vunpack.c.l.b16 %v43
    %v154 = vunpack.c.l.b16 %v44
    %v155 = vunpack.c.l.b16 %v45
    %v156 = vunpack.c.l.b16 %v46
    %v157 = vunpack.c.l.b16 %v47
    %v158 = vunpack.c.l.b16 %v48
    %v159 = vunpack.c.l.b16 %v49
    %v160 = vunpack.c.l.b16 %v50
    %v161 = vunpack.c.l.b16 %v51
    %v162 = vunpack.c.l.b16 %v52
    %v163 = vunpack.c.l.b16 %v53
    %v164 = vunpack.c.l.b16 %v54
    %v165 = vunpack.c.l.b16 %v55
    %v166 = vunpack.c.l.b16 %v56
    %v167 = vunpack.c.l.b16 %v57
    %v168 = vunpack.c.l.b16 %v58
    %v169 = vunpack.c.l.b16 %v59
    %v170 = vunpack.c.l.b16 %v60
    %v171 = vunpack.c.l.b16 %v61
    %v172 = vunpack.c.l.b16 %v62
    %v173 = vunpack.c.l.b16 %v63
    %v174 = vunpack.c.l.b16 %v64
    %v175 = vpack.c.b16 %v127, %v126
    %v176 = vpack.c.b16 %v129, %v128
    %v177 = vpack.c.b16 %v131, %v130
    %v178 = vpack.c.b16 %v133, %v132
    %v179 = vpack.c.b16 %v135, %v134
    %v180 = vpack.c.b16 %v137, %v136
    %v181 = vpack.c.b16 %v139, %v138
    %v182 = vpack.c.b16 %v141, %v140
    %v183 = vpack.c.b16 %v143, %v142
    %v184 = vpack.c.b16 %v145, %v144
    %v185 = vpack.c.b16 %v147, %v146
    %v186 = vpack.c.b16 %v149, %v148
    %v187 = vpack.c.b16 %v151, %v150
    %v188 = vpack.c.b16 %v153, %v152
    %v189 = vpack.c.b16 %v155, %v154
    %v190 = vpack.c.b16 %v157, %v156
    %v191 = vpack.c.b16 %v159, %v158
    %v192 = vpack.c.b16 %v161, %v160
    %v193 = vpack.c.b16 %v163, %v162
    %v194 = vpack.c.b16 %v165, %v164
    %v195 = vpack.c.b16 %v167, %v166
    %v196 = vpack.c.b16 %v169, %v168
    %v197 = vpack.c.b16 %v171, %v170
    %v198 = vpack.c.b16 %v173, %v172
    %v199 = vpack.c.b16 %v174, %v174
    %v205 = vunpack.c.l.b16 %v65
    %v206 = vunpack.c.l.b16 %v66
    %v207 = vunpack.c.l.b16 %v67
    %v208 = vunpack.c.l.b16 %v68
    %v209 = vunpack.c.l.b16 %v69
    %v210 = vpack.c.b16 %v206, %v205
    %v211 = vpack.c.b16 %v208, %v207
    %v212 = vpack.c.b16 %v209, %v209
    %vm215 = vcmask 293888
    %v217 = vsel %vm215, %v175, 0
    %v220 = vsel %vm215, %v176, 0
    %v223 = vsel %vm215, %v177, 0
    %v226 = vsel %vm215, %v178, 0
    %v229 = vsel %vm215, %v179, 0
    %v232 = vsel %vm215, %v180, 0
    %v235 = vsel %vm215, %v181, 0
    %v238 = vsel %vm215, %v182, 0
    %v241 = vsel %vm215, %v183, 0
    %v244 = vsel %vm215, %v184, 0
    %v247 = vsel %vm215, %v185, 0
    %v250 = vsel %vm215, %v186, 0
    %v253 = vsel %vm215, %v187, 0
    %v256 = vsel %vm215, %v188, 0
    %v259 = vsel %vm215, %v189, 0
    %v262 = vsel %vm215, %v190, 0
    %v265 = vsel %vm215, %v191, 0
    %v268 = vsel %vm215, %v192, 0
    %v271 = vsel %vm215, %v193, 0
    %v274 = vsel %vm215, %v194, 0
    %v277 = vsel %vm215, %v195, 0
    %v280 = vsel %vm215, %v196, 0
    %v283 = vsel %vm215, %v197, 0
    %v286 = vsel %vm215, %v198, 0
    %v289 = vsel %vm215, %v199, 0
    %vm291 = vcmask 1041408
    %v293 = vsel %vm291, %v212, 0
    %295 = vmatprep.subr.bf16.mxu0 0
    %296 = vmatpush1.bf16.msra.mxu0 %v210
    %297 = vmatprep.subr.bf16.mxu0 0
    %298 = vmatpush1.bf16.msra.mxu0 %v211
    %299 = vmatprep.subr.bf16.mxu0 0
    %300 = vmatpush1.bf16.msra.mxu0 %v293
    %301 = vmatprep.subr.bf16.mxu0 0
    %302 = vmatpush1.bf16.msra.mxu0 0
    %303 = vmatprep.subr.bf16.mxu0 0
    %304 = vmatpush1.bf16.msra.mxu0 0
    %305 = vmatprep.subr.bf16.mxu0 0
    %306 = vmatpush1.bf16.msra.mxu0 0
    %307 = vmatprep.subr.bf16.mxu0 0
    %308 = vmatpush1.bf16.msra.mxu0 0
    %309 = vmatprep.subr.bf16.mxu0 0
    %310 = vmatpush1.bf16.msra.mxu0 0
    %311 = vmatprep.subr.bf16.mxu0 0
    %312 = vmatpush1.bf16.msra.mxu0 0
    %313 = vmatprep.subr.bf16.mxu0 0
    %314 = vmatpush1.bf16.msra.mxu0 0
    %315 = vmatprep.subr.bf16.mxu0 0
    %316 = vmatpush1.bf16.msra.mxu0 0
    %317 = vmatprep.subr.bf16.mxu0 0
    %318 = vmatpush1.bf16.msra.mxu0 0
    %319 = vmatprep.subr.bf16.mxu0 0
    %320 = vmatpush1.bf16.msra.mxu0 0
    %321 = vmatprep.subr.bf16.mxu0 0
    %322 = vmatpush1.bf16.msra.mxu0 0
    %323 = vmatprep.subr.bf16.mxu0 0
    %324 = vmatpush1.bf16.msra.mxu0 0
    %325 = vmatprep.subr.bf16.mxu0 0
    %326 = vmatpush1.bf16.msra.mxu0 0
    %327 = vmatprep.mubr.bf16.mxu0 0
    %328 = vmatmul.mubr.bf16.gmra.mrb[0].mxu0 %v217
    %v329 = vpop.f32.mrb[0].mxu0
    %v330 = vadd.f32 %v75, %v329
    %v331 = vpop.f32.mrb[0].mxu0
    %v332 = vpop.f32.mrb[0].mxu0
    %v333 = vadd.f32 %v75, %v332
    %v334 = vpop.f32.mrb[0].mxu0
    %335 = vmatprep.mubr.bf16.mxu0 0
    %336 = vmatmul.mubr.bf16.gmra.mrb[0].mxu0 %v220
    %v337 = vpop.f32.mrb[0].mxu0
    %v338 = vadd.f32 %v75, %v337
    %v339 = vpop.f32.mrb[0].mxu0
    %v340 = vpop.f32.mrb[0].mxu0
    %v341 = vadd.f32 %v75, %v340
    %v342 = vpop.f32.mrb[0].mxu0
    %343 = vmatprep.mubr.bf16.mxu0 0
    %344 = vmatmul.mubr.bf16.gmra.mrb[0].mxu0 %v223
    %v345 = vpop.f32.mrb[0].mxu0
    %v346 = vadd.f32 %v75, %v345
    %v347 = vpop.f32.mrb[0].mxu0
    %v348 = vpop.f32.mrb[0].mxu0
    %v349 = vadd.f32 %v75, %v348
    %v350 = vpop.f32.mrb[0].mxu0
    %351 = vmatprep.mubr.bf16.mxu0 0
    %352 = vmatmul.mubr.bf16.gmra.mrb[0].mxu0 %v226
    %v353 = vpop.f32.mrb[0].mxu0
    %v354 = vadd.f32 %v75, %v353
    %v355 = vpop.f32.mrb[0].mxu0
    %v356 = vpop.f32.mrb[0].mxu0
    %v357 = vadd.f32 %v75, %v356
    %v358 = vpop.f32.mrb[0].mxu0
    %359 = vmatprep.mubr.bf16.mxu0 0
    %360 = vmatmul.mubr.bf16.gmra.mrb[0].mxu0 %v229
    %v361 = vpop.f32.mrb[0].mxu0
    %v362 = vadd.f32 %v75, %v361
    %v363 = vpop.f32.mrb[0].mxu0
    %v364 = vpop.f32.mrb[0].mxu0
    %v365 = vadd.f32 %v75, %v364
    %v366 = vpop.f32.mrb[0].mxu0
    %367 = vmatprep.mubr.bf16.mxu0 0
    %368 = vmatmul.mubr.bf16.gmra.mrb[0].mxu0 %v232
    %v369 = vpop.f32.mrb[0].mxu0
    %v370 = vadd.f32 %v75, %v369
    %v371 = vpop.f32.mrb[0].mxu0
    %v372 = vpop.f32.mrb[0].mxu0
    %v373 = vadd.f32 %v75, %v372
    %v374 = vpop.f32.mrb[0].mxu0
    %375 = vmatprep.mubr.bf16.mxu0 0
    %376 = vmatmul.mubr.bf16.gmra.mrb[0].mxu0 %v235
    %v377 = vpop.f32.mrb[0].mxu0
    %v378 = vadd.f32 %v75, %v377
    %v379 = vpop.f32.mrb[0].mxu0
    %v380 = vpop.f32.mrb[0].mxu0
    %v381 = vadd.f32 %v75, %v380
    %v382 = vpop.f32.mrb[0].mxu0
    %383 = vmatprep.mubr.bf16.mxu0 0
    %384 = vmatmul.mubr.bf16.gmra.mrb[0].mxu0 %v238
    %v385 = vpop.f32.mrb[0].mxu0
    %v386 = vadd.f32 %v75, %v385
    %v387 = vpop.f32.mrb[0].mxu0
    %v388 = vpop.f32.mrb[0].mxu0
    %v389 = vadd.f32 %v75, %v388
    %v390 = vpop.f32.mrb[0].mxu0
    %391 = vmatprep.mubr.bf16.mxu0 0
    %392 = vmatmul.mubr.bf16.gmra.mrb[0].mxu0 %v241
    %v393 = vpop.f32.mrb[0].mxu0
    %v394 = vadd.f32 %v75, %v393
    %v395 = vpop.f32.mrb[0].mxu0
    %v396 = vpop.f32.mrb[0].mxu0
    %v397 = vadd.f32 %v75, %v396
    %v398 = vpop.f32.mrb[0].mxu0
    %399 = vmatprep.mubr.bf16.mxu0 0
    %400 = vmatmul.mubr.bf16.gmra.mrb[0].mxu0 %v244
    %v401 = vpop.f32.mrb[0].mxu0
    %v402 = vadd.f32 %v75, %v401
    %v403 = vpop.f32.mrb[0].mxu0
    %v404 = vpop.f32.mrb[0].mxu0
    %v405 = vadd.f32 %v75, %v404
    %v406 = vpop.f32.mrb[0].mxu0
    %407 = vmatprep.mubr.bf16.mxu0 0
    %408 = vmatmul.mubr.bf16.gmra.mrb[0].mxu0 %v247
    %v409 = vpop.f32.mrb[0].mxu0
    %v410 = vadd.f32 %v75, %v409
    %v411 = vpop.f32.mrb[0].mxu0
    %v412 = vpop.f32.mrb[0].mxu0
    %v413 = vadd.f32 %v75, %v412
    %v414 = vpop.f32.mrb[0].mxu0
    %415 = vmatprep.mubr.bf16.mxu0 0
    %416 = vmatmul.mubr.bf16.gmra.mrb[0].mxu0 %v250
    %v417 = vpop.f32.mrb[0].mxu0
    %v418 = vadd.f32 %v75, %v417
    %v419 = vpop.f32.mrb[0].mxu0
    %v420 = vpop.f32.mrb[0].mxu0
    %v421 = vadd.f32 %v75, %v420
    %v422 = vpop.f32.mrb[0].mxu0
    %423 = vmatprep.mubr.bf16.mxu0 0
    %424 = vmatmul.mubr.bf16.gmra.mrb[0].mxu0 %v253
    %v425 = vpop.f32.mrb[0].mxu0
    %v426 = vadd.f32 %v75, %v425
    %v427 = vpop.f32.mrb[0].mxu0
    %v428 = vpop.f32.mrb[0].mxu0
    %v429 = vadd.f32 %v75, %v428
    %v430 = vpop.f32.mrb[0].mxu0
    %431 = vmatprep.mubr.bf16.mxu0 0
    %432 = vmatmul.mubr.bf16.gmra.mrb[0].mxu0 %v256
    %v433 = vpop.f32.mrb[0].mxu0
    %v434 = vadd.f32 %v75, %v433
    %v435 = vpop.f32.mrb[0].mxu0
    %v436 = vpop.f32.mrb[0].mxu0
    %v437 = vadd.f32 %v75, %v436
    %v438 = vpop.f32.mrb[0].mxu0
    %439 = vmatprep.mubr.bf16.mxu0 0
    %440 = vmatmul.mubr.bf16.gmra.mrb[0].mxu0 %v259
    %v441 = vpop.f32.mrb[0].mxu0
    %v442 = vadd.f32 %v75, %v441
    %v443 = vpop.f32.mrb[0].mxu0
    %v444 = vpop.f32.mrb[0].mxu0
    %v445 = vadd.f32 %v75, %v444
    %v446 = vpop.f32.mrb[0].mxu0
    %447 = vmatprep.mubr.bf16.mxu0 0
    %448 = vmatmul.mubr.bf16.gmra.mrb[0].mxu0 %v262
    %v449 = vpop.f32.mrb[0].mxu0
    %v450 = vadd.f32 %v75, %v449
    %v451 = vpop.f32.mrb[0].mxu0
    %v452 = vpop.f32.mrb[0].mxu0
    %v453 = vadd.f32 %v75, %v452
    %v454 = vpop.f32.mrb[0].mxu0
    %455 = vmatprep.mubr.bf16.mxu0 0
    %456 = vmatmul.mubr.bf16.gmra.mrb[0].mxu0 %v265
    %v457 = vpop.f32.mrb[0].mxu0
    %v458 = vadd.f32 %v75, %v457
    %v459 = vpop.f32.mrb[0].mxu0
    %v460 = vpop.f32.mrb[0].mxu0
    %v461 = vadd.f32 %v75, %v460
    %v462 = vpop.f32.mrb[0].mxu0
    %463 = vmatprep.mubr.bf16.mxu0 0
    %464 = vmatmul.mubr.bf16.gmra.mrb[0].mxu0 %v268
    %v465 = vpop.f32.mrb[0].mxu0
    %v466 = vadd.f32 %v75, %v465
    %v467 = vpop.f32.mrb[0].mxu0
    %v468 = vpop.f32.mrb[0].mxu0
    %v469 = vadd.f32 %v75, %v468
    %v470 = vpop.f32.mrb[0].mxu0
    %471 = vmatprep.mubr.bf16.mxu0 0
    %472 = vmatmul.mubr.bf16.gmra.mrb[0].mxu0 %v271
    %v473 = vpop.f32.mrb[0].mxu0
    %v474 = vadd.f32 %v75, %v473
    %v475 = vpop.f32.mrb[0].mxu0
    %v476 = vpop.f32.mrb[0].mxu0
    %v477 = vadd.f32 %v75, %v476
    %v478 = vpop.f32.mrb[0].mxu0
    %479 = vmatprep.mubr.bf16.mxu0 0
    %480 = vmatmul.mubr.bf16.gmra.mrb[0].mxu0 %v274
    %v481 = vpop.f32.mrb[0].mxu0
    %v482 = vadd.f32 %v75, %v481
    %v483 = vpop.f32.mrb[0].mxu0
    %v484 = vpop.f32.mrb[0].mxu0
    %v485 = vadd.f32 %v75, %v484
    %v486 = vpop.f32.mrb[0].mxu0
    %487 = vmatprep.mubr.bf16.mxu0 0
    %488 = vmatmul.mubr.bf16.gmra.mrb[0].mxu0 %v277
    %v489 = vpop.f32.mrb[0].mxu0
    %v490 = vadd.f32 %v75, %v489
    %v491 = vpop.f32.mrb[0].mxu0
    %v492 = vpop.f32.mrb[0].mxu0
    %v493 = vadd.f32 %v75, %v492
    %v494 = vpop.f32.mrb[0].mxu0
    %495 = vmatprep.mubr.bf16.mxu0 0
    %496 = vmatmul.mubr.bf16.gmra.mrb[0].mxu0 %v280
    %v497 = vpop.f32.mrb[0].mxu0
    %v498 = vadd.f32 %v75, %v497
    %v499 = vpop.f32.mrb[0].mxu0
    %v500 = vpop.f32.mrb[0].mxu0
    %v501 = vadd.f32 %v75, %v500
    %v502 = vpop.f32.mrb[0].mxu0
    %503 = vmatprep.mubr.bf16.mxu0 0
    %504 = vmatmul.mubr.bf16.gmra.mrb[0].mxu0 %v283
    %v505 = vpop.f32.mrb[0].mxu0
    %v506 = vadd.f32 %v75, %v505
    %v507 = vpop.f32.mrb[0].mxu0
    %v508 = vpop.f32.mrb[0].mxu0
    %v509 = vadd.f32 %v75, %v508
    %v510 = vpop.f32.mrb[0].mxu0
    %511 = vmatprep.mubr.bf16.mxu0 0
    %512 = vmatmul.mubr.bf16.gmra.mrb[0].mxu0 %v286
    %v513 = vpop.f32.mrb[0].mxu0
    %v514 = vadd.f32 %v75, %v513
    %v515 = vpop.f32.mrb[0].mxu0
    %v516 = vpop.f32.mrb[0].mxu0
    %v517 = vadd.f32 %v75, %v516
    %v518 = vpop.f32.mrb[0].mxu0
    %519 = vmatprep.mubr.bf16.mxu0 0
    %520 = vmatmul.mubr.bf16.gmra.mrb[0].mxu0 %v289
    %v521 = vpop.f32.mrb[0].mxu0
    %v522 = vadd.f32 %v75, %v521
    %v523 = vpop.f32.mrb[0].mxu0
    %v524 = vpop.f32.mrb[0].mxu0
    %v525 = vpop.f32.mrb[0].mxu0
    %526 = vdwg.mxu0
    %v527 = vmax.f32 %v330, 0.0
    %v528 = vmax.f32 %v333, 0.0
    %v529 = vmax.f32 %v338, 0.0
    %v530 = vmax.f32 %v341, 0.0
    %v531 = vmax.f32 %v346, 0.0
    %v532 = vmax.f32 %v349, 0.0
    %v533 = vmax.f32 %v354, 0.0
    %v534 = vmax.f32 %v357, 0.0
    %v535 = vmax.f32 %v362, 0.0
    %v536 = vmax.f32 %v365, 0.0
    %v537 = vmax.f32 %v370, 0.0
    %v538 = vmax.f32 %v373, 0.0
    %v539 = vmax.f32 %v378, 0.0
    %v540 = vmax.f32 %v381, 0.0
    %v541 = vmax.f32 %v386, 0.0
    %v542 = vmax.f32 %v389, 0.0
    %v543 = vmax.f32 %v394, 0.0
    %v544 = vmax.f32 %v397, 0.0
    %v545 = vmax.f32 %v402, 0.0
    %v546 = vmax.f32 %v405, 0.0
    %v547 = vmax.f32 %v410, 0.0
    %v548 = vmax.f32 %v413, 0.0
    %v549 = vmax.f32 %v418, 0.0
    %v550 = vmax.f32 %v421, 0.0
    %v551 = vmax.f32 %v426, 0.0
    %v552 = vmax.f32 %v429, 0.0
    %v553 = vmax.f32 %v434, 0.0
    %v554 = vmax.f32 %v437, 0.0
    %v555 = vmax.f32 %v442, 0.0
    %v556 = vmax.f32 %v445, 0.0
    %v557 = vmax.f32 %v450, 0.0
    %v558 = vmax.f32 %v453, 0.0
    %v559 = vmax.f32 %v458, 0.0
    %v560 = vmax.f32 %v461, 0.0
    %v561 = vmax.f32 %v466, 0.0
    %v562 = vmax.f32 %v469, 0.0
    %v563 = vmax.f32 %v474, 0.0
    %v564 = vmax.f32 %v477, 0.0
    %v565 = vmax.f32 %v482, 0.0
    %v566 = vmax.f32 %v485, 0.0
    %v567 = vmax.f32 %v490, 0.0
    %v568 = vmax.f32 %v493, 0.0
    %v569 = vmax.f32 %v498, 0.0
    %v570 = vmax.f32 %v501, 0.0
    %v571 = vmax.f32 %v506, 0.0
    %v572 = vmax.f32 %v509, 0.0
    %v573 = vmax.f32 %v514, 0.0
    %v574 = vmax.f32 %v517, 0.0
    %v575 = vmax.f32 %v522, 0.0
    %576 = vst [vmem:[#allocation2] sm:$0xff] %v527
    %577 = vst [vmem:[#allocation2 + $0x8] sm:$0xff] %v528
    %578 = vst [vmem:[#allocation2 + $0x10] sm:$0xff] %v529
    %579 = vst [vmem:[#allocation2 + $0x18] sm:$0xff] %v530
    %580 = vst [vmem:[#allocation2 + $0x20] sm:$0xff] %v531
    %581 = vst [vmem:[#allocation2 + $0x28] sm:$0xff] %v532
    %582 = vst [vmem:[#allocation2 + $0x30] sm:$0xff] %v533
    %583 = vst [vmem:[#allocation2 + $0x38] sm:$0xff] %v534
    %584 = vst [vmem:[#allocation2 + $0x40] sm:$0xff] %v535
    %585 = vst [vmem:[#allocation2 + $0x48] sm:$0xff] %v536
    %586 = vst [vmem:[#allocation2 + $0x50] sm:$0xff] %v537
    %587 = vst [vmem:[#allocation2 + $0x58] sm:$0xff] %v538
    %588 = vst [vmem:[#allocation2 + $0x60] sm:$0xff] %v539
    %589 = vst [vmem:[#allocation2 + $0x68] sm:$0xff] %v540
    %590 = vst [vmem:[#allocation2 + $0x70] sm:$0xff] %v541
    %591 = vst [vmem:[#allocation2 + $0x78] sm:$0xff] %v542
    %592 = vst [vmem:[#allocation2 + $0x80] sm:$0xff] %v543
    %593 = vst [vmem:[#allocation2 + $0x88] sm:$0xff] %v544
    %594 = vst [vmem:[#allocation2 + $0x90] sm:$0xff] %v545
    %595 = vst [vmem:[#allocation2 + $0x98] sm:$0xff] %v546
    %596 = vst [vmem:[#allocation2 + $0xa0] sm:$0xff] %v547
    %597 = vst [vmem:[#allocation2 + $0xa8] sm:$0xff] %v548
    %598 = vst [vmem:[#allocation2 + $0xb0] sm:$0xff] %v549
    %599 = vst [vmem:[#allocation2 + $0xb8] sm:$0xff] %v550
    %600 = vst [vmem:[#allocation2 + $0xc0] sm:$0xff] %v551
    %601 = vst [vmem:[#allocation2 + $0xc8] sm:$0xff] %v552
    %602 = vst [vmem:[#allocation2 + $0xd0] sm:$0xff] %v553
    %603 = vst [vmem:[#allocation2 + $0xd8] sm:$0xff] %v554
    %604 = vst [vmem:[#allocation2 + $0xe0] sm:$0xff] %v555
    %605 = vst [vmem:[#allocation2 + $0xe8] sm:$0xff] %v556
    %606 = vst [vmem:[#allocation2 + $0xf0] sm:$0xff] %v557
    %607 = vst [vmem:[#allocation2 + $0xf8] sm:$0xff] %v558
    %608 = vst [vmem:[#allocation2 + $0x100] sm:$0xff] %v559
    %609 = vst [vmem:[#allocation2 + $0x108] sm:$0xff] %v560
    %610 = vst [vmem:[#allocation2 + $0x110] sm:$0xff] %v561
    %611 = vst [vmem:[#allocation2 + $0x118] sm:$0xff] %v562
    %612 = vst [vmem:[#allocation2 + $0x120] sm:$0xff] %v563
    %613 = vst [vmem:[#allocation2 + $0x128] sm:$0xff] %v564
    %614 = vst [vmem:[#allocation2 + $0x130] sm:$0xff] %v565
    %615 = vst [vmem:[#allocation2 + $0x138] sm:$0xff] %v566
    %616 = vst [vmem:[#allocation2 + $0x140] sm:$0xff] %v567
    %617 = vst [vmem:[#allocation2 + $0x148] sm:$0xff] %v568
    %618 = vst [vmem:[#allocation2 + $0x150] sm:$0xff] %v569
    %619 = vst [vmem:[#allocation2 + $0x158] sm:$0xff] %v570
    %620 = vst [vmem:[#allocation2 + $0x160] sm:$0xff] %v571
    %621 = vst [vmem:[#allocation2 + $0x168] sm:$0xff] %v572
    %622 = vst [vmem:[#allocation2 + $0x170] sm:$0xff] %v573
    %623 = vst [vmem:[#allocation2 + $0x178] sm:$0xff] %v574
    %624 = vst [vmem:[#allocation2 + $0x180] sm:$0xff] %v575
    // Predicated region
    $region14: #{tpu_custom_call.1} parent=1 // pred_check
      _
    $region15: #{tpu_custom_call.1} parent=1 // pred_check_branch
      %626 = sbr.rel (0) target = $region17
    $region16: #{tpu_custom_call.1} parent=1 // pred_region
      %s628 = ssub.s32 6272, 6272
      %629 = vsyncadd [#allocation3], %s628
      %s630 = sshll.u32 [#allocation2], 4
      %s631 = int_to_ptr.vmem [resolvable:$true] %s630
      %636 = dma.vmem_to_hbm [thread:$0]  %s631, 6272, %s3, [#allocation3], 128, 128, 8
    $region17: #{tpu_custom_call.1} parent=1 // pred_fallthru
      _
    // Predicated region
    $region18: #{tpu_custom_call.1} parent=1 // pred_check
      _
    $region19: #{tpu_custom_call.1} parent=1 // pred_check_branch
      %638 = sbr.rel (0) target = $region21
    $region20: #{tpu_custom_call.1} parent=1 // pred_region
      %639 = dma.done [#allocation3], 6272
    $region21: #{tpu_custom_call.1} parent=1 // pred_fallthru
      _
    %640 = vsyncpa [#allocation3], 1

</llo_original>
